<compile_context>
chip_gen: v5e
topology: v5e:2x2
jax: 0.10.0
libtpu: 0.0.40
codegen_flags: <defaults>
</compile_context>

<pallas_src>
import functools

import numpy as np
import jax
import jax.numpy as jnp
from jax.experimental import pallas as pl
from jax.experimental.pallas import tpu as pltpu

_EPS = 1e-5  # torch.nn.BatchNorm1d default eps


def _pad128(n):
    return max(128, ((n + 127) // 128) * 128)


def _normal_kl(mu, sigma):
    # KL(N(mu, sigma^2) || N(0, 1)) summed over elements (HierarchicalNormalPrior
    # with default group/individual mu=0, logvar=0).
    return jnp.sum(-jnp.log(sigma) + 0.5 * (sigma * sigma + mu * mu) - 0.5)


def _pad_wT(wT, in_pad, out_pad, scale):
    """[In, Out] f32 weight -> zero-padded bf16 [In_pad, Out_pad], 1/keep folded in."""
    in_f, out_f = wT.shape
    wt = (wT * scale).astype(jnp.bfloat16)
    return jnp.pad(wt, ((0, in_pad - in_f), (0, out_pad - out_f)))


def _pad_row(v, out_pad):
    """[F] f32 vector -> zero-padded [1, F_pad] f32 row."""
    row = jnp.asarray(v, jnp.float32).reshape(1, -1)
    return jnp.pad(row, ((0, 0), (0, out_pad - row.shape[1])))


# --------------------------------------------------------------------------
# Fused forward kernel (built for a static layer plan)
# --------------------------------------------------------------------------
def _make_fused_kernel(plan):
    """plan: tuple of "bayes" (3 refs: mask, wT, bias), "bnrelu" (2 refs: gamma,
    beta) and "res" (10 refs: g1,b1,g2,b2, m1,w1,c1, m2,w2,c2) steps."""

    def kernel(x_ref, *refs):
        y_ref = refs[-1]
        prefs = refs[:-1]
        idx = 0

        def take(n):
            nonlocal idx
            vals = prefs[idx:idx + n]
            idx += n
            return vals

        def bn_relu(v, g_ref, b_ref):
            # BatchNorm1d (training mode, biased stats) folded into one affine pass.
            mean = jnp.mean(v, axis=0, keepdims=True)
            mean_sq = jnp.mean(v * v, axis=0, keepdims=True)
            var = mean_sq - mean * mean
            s = g_ref[...] * jax.lax.rsqrt(var + _EPS)
            t = b_ref[...] - mean * s
            return jnp.maximum(v * s + t, 0.0)

        def drop_linear(v, m_ref, w_ref, b_ref):
            # Dropout mask (bf16 0/1; 1/keep already folded into w), then MXU matmul
            # bf16 x bf16 with f32 accumulation.  Weight is pre-transposed [In, Out].
            v16 = v.astype(jnp.bfloat16) * m_ref[...]
            return jnp.dot(v16, w_ref[...],
                           preferred_element_type=jnp.float32) + b_ref[...]

        h = x_ref[...]
        for step in plan:
            if step == "bayes":
                m, w, b = take(3)
                h = drop_linear(h, m, w, b)
            elif step == "bnrelu":
                g, b = take(2)
                h = bn_relu(h, g, b)
            else:  # residual block
                g1, b1, g2, b2, m1, w1, c1, m2, w2, c2 = take(10)
                identity = h
                out = bn_relu(h, g1, b1)
                out = drop_linear(out, m1, w1, c1)
                out = bn_relu(out, g2, b2)
                out = drop_linear(out, m2, w2, c2)
                h = out + identity
        y_ref[...] = h

    return kernel


# --------------------------------------------------------------------------
# Wrapper: sampling, softplus, KL, dropout masks, padding (plain JAX under jit)
# --------------------------------------------------------------------------
def _sample_bayes(p, key):
    k_gw, k_gb, k_iw, k_ib = jax.random.split(key, 4)
    gw_sigma = jax.nn.softplus(p["gw_rho"])
    gb_sigma = jax.nn.softplus(p["gb_rho"])
    iw_sigma = jax.nn.softplus(p["iw_rho"])
    ib_sigma = jax.nn.softplus(p["ib_rho"])

    gw = p["gw_mu"] + gw_sigma * jax.random.normal(k_gw, p["gw_mu"].shape, jnp.float32)
    gb = p["gb_mu"] + gb_sigma * jax.random.normal(k_gb, p["gb_mu"].shape, jnp.float32)
    iw = p["iw_mu"] + iw_sigma * jax.random.normal(k_iw, p["iw_mu"].shape, jnp.float32)
    ib = p["ib_mu"] + ib_sigma * jax.random.normal(k_ib, p["ib_mu"].shape, jnp.float32)

    wT = gw + iw            # [In, Out] (parameters stored pre-transposed)
    bias = gb + ib          # [Out]
    kl = (_normal_kl(p["gw_mu"], gw_sigma) + _normal_kl(p["iw_mu"], iw_sigma) +
          _normal_kl(p["gb_mu"], gb_sigma) + _normal_kl(p["ib_mu"], ib_sigma))
    return wT, bias, kl


def hbnn_forward(params, x, key, *, kinds, dropout_rate=0.1):
    keep = 1.0 - float(dropout_rate)
    inv_keep = np.float32(1.0 / keep) if keep < 1.0 else np.float32(1.0)
    B, in_f = x.shape
    in_pad = _pad128(in_f)

    n_bayes = 2 + sum(1 for k in kinds if k == "bayes")
    n_res = sum(1 for k in kinds if k == "res")
    n_drop = n_bayes + 2 * n_res
    keys = jax.random.split(key, n_bayes + n_drop)
    bayes_keys = iter(keys[:n_bayes])
    drop_keys = iter(keys[n_bayes:])

    kl_sum = jnp.float32(0.0)
    inputs, plan = [], []
    flops, transc = 0, 0
    cur_f, cur_pad = in_f, in_pad

    def make_mask(pad_dim):
        if keep >= 1.0:
            return jnp.ones((B, pad_dim), jnp.bfloat16)
        k = next(drop_keys)
        return jax.random.bernoulli(k, keep, (B, pad_dim)).astype(jnp.bfloat16)

    def add_bayes(p):
        nonlocal cur_f, cur_pad, kl_sum, flops
        wT, b, kl = _sample_bayes(p, next(bayes_keys))
        kl_sum = kl_sum + kl
        out_f = wT.shape[1]
        out_pad = _pad128(out_f)
        inputs.append(make_mask(cur_pad))
        inputs.append(_pad_wT(wT, cur_pad, out_pad, inv_keep))
        inputs.append(_pad_row(b, out_pad))
        plan.append("bayes")
        flops += 2 * B * cur_pad * out_pad
        cur_f, cur_pad = out_f, out_pad

    def add_bnrelu(p):
        nonlocal transc
        inputs.append(_pad_row(p["gamma"], cur_pad))
        inputs.append(_pad_row(p["beta"], cur_pad))
        plan.append("bnrelu")
        transc += cur_pad

    def add_res(p):
        nonlocal flops, transc
        inputs.extend([
            _pad_row(p["bn1"]["gamma"], cur_pad), _pad_row(p["bn1"]["beta"], cur_pad),
            _pad_row(p["bn2"]["gamma"], cur_pad), _pad_row(p["bn2"]["beta"], cur_pad),
        ])
        inputs.append(make_mask(cur_pad))
        inputs.append(_pad_wT(p["fc1"]["wT"], cur_pad, cur_pad, inv_keep))
        inputs.append(_pad_row(p["fc1"]["b"], cur_pad))
        inputs.append(make_mask(cur_pad))
        inputs.append(_pad_wT(p["fc2"]["wT"], cur_pad, cur_pad, inv_keep))
        inputs.append(_pad_row(p["fc2"]["b"], cur_pad))
        plan.append("res")
        flops += 4 * B * cur_pad * cur_pad
        transc += 2 * cur_pad

    add_bayes(params["input_layer"])
    add_bnrelu(params["bn_layers"][0])
    for i, kind in enumerate(kinds):
        p = params["hidden_layers"][i]
        if kind == "res":
            add_res(p)
        else:
            add_bayes(p)
            add_bnrelu(params["bn_layers"][i // 2 + 1])
    add_bayes(params["output_layer"])

    out_f, out_pad = cur_f, cur_pad
    x_pad = jnp.pad(x.astype(jnp.float32), ((0, 0), (0, in_pad - in_f)))

    total_bytes = x_pad.size * 4 + B * out_pad * 4
    for a in inputs:
        total_bytes += a.size * a.dtype.itemsize
    # Cap at 64 MiB (v7x physical VMEM); everything here is VMEM-resident.
    vmem_limit = int(min(64 * 2**20, max(8 * 2**20, 2 * total_bytes + (1 << 21))))

    y_pad = pl.pallas_call(
        _make_fused_kernel(tuple(plan)),
        out_shape=jax.ShapeDtypeStruct((B, out_pad), jnp.float32),
        in_specs=[pl.BlockSpec(memory_space=pltpu.MemorySpace.VMEM)] * (1 + len(inputs)),
        out_specs=pl.BlockSpec(memory_space=pltpu.MemorySpace.VMEM),
        compiler_params=pltpu.CompilerParams(vmem_limit_bytes=vmem_limit),
        cost_estimate=pl.CostEstimate(flops=int(flops), transcendentals=int(transc),
                                      bytes_accessed=int(total_bytes)),
    )(x_pad, *inputs)

    return y_pad[:, :out_f], kl_sum


# --------------------------------------------------------------------------
# Deterministic parameter init (matches the PyTorch __init__ shapes / inits,
# but variational weights are stored pre-transposed [In, Out] so no per-call
# transpose of the freshly sampled weights is needed).
# --------------------------------------------------------------------------
def init_bayes_linear(key, in_f, out_f):
    ks = jax.random.split(key, 4)
    wb = 1.0 / np.sqrt(in_f)  # kaiming_uniform_(a=sqrt(5)) bound
    return dict(
        gw_mu=jax.random.uniform(ks[0], (in_f, out_f), jnp.float32, -wb, wb),
        gw_rho=jnp.full((in_f, out_f), -5.0, jnp.float32),
        gb_mu=jax.random.uniform(ks[1], (out_f,), jnp.float32, -0.1, 0.1),
        gb_rho=jnp.full((out_f,), -5.0, jnp.float32),
        iw_mu=jax.random.uniform(ks[2], (in_f, out_f), jnp.float32, -wb, wb),
        iw_rho=jnp.full((in_f, out_f), -5.0, jnp.float32),
        ib_mu=jax.random.uniform(ks[3], (out_f,), jnp.float32, -0.1, 0.1),
        ib_rho=jnp.full((out_f,), -5.0, jnp.float32),
    )


def init_linear(key, in_f, out_f):
    k1, k2 = jax.random.split(key)
    wb = 1.0 / np.sqrt(in_f)
    return dict(wT=jax.random.uniform(k1, (in_f, out_f), jnp.float32, -wb, wb),
                b=jax.random.uniform(k2, (out_f,), jnp.float32, -wb, wb))


def init_bn(dim):
    return dict(gamma=jnp.ones((dim,), jnp.float32),
                beta=jnp.zeros((dim,), jnp.float32))


def init_resblock(key, dim):
    k1, k2 = jax.random.split(key)
    return dict(bn1=init_bn(dim), bn2=init_bn(dim),
                fc1=init_linear(k1, dim, dim), fc2=init_linear(k2, dim, dim))


def init_model(key, input_dim, hidden_dims, output_dim):
    keys = jax.random.split(key, 2 * len(hidden_dims) + 2)
    ki = iter(keys)
    params = {}
    params["input_layer"] = init_bayes_linear(next(ki), input_dim, hidden_dims[0])
    hidden, kinds = [], []
    for i in range(len(hidden_dims) - 1):
        hidden.append(init_resblock(next(ki), hidden_dims[i]))
        kinds.append("res")
        hidden.append(init_bayes_linear(next(ki), hidden_dims[i], hidden_dims[i + 1]))
        kinds.append("bayes")
    params["hidden_layers"] = hidden
    params["output_layer"] = init_bayes_linear(next(ki), hidden_dims[-1], output_dim)
    params["bn_layers"] = [init_bn(d) for d in hidden_dims]
    return params, tuple(kinds)


# --------------------------------------------------------------------------
if __name__ == "__main__":
    key = jax.random.PRNGKey(0)
    k_param, k_x, k_fwd = jax.random.split(key, 3)

    # Small demo shapes.  For real use, fold the Monte-Carlo sample dimension
    # (model.predict's num_samples) into the batch so M >= 128/256 fills the MXU.
    batch = 32
    input_dim = 16
    hidden_dims = [32, 32]
    output_dim = 8

    params, kinds = init_model(k_param, input_dim, hidden_dims, output_dim)
    x = jax.random.normal(k_x, (batch, input_dim), jnp.float32)

    fwd = jax.jit(functools.partial(hbnn_forward, kinds=kinds, dropout_rate=0.1))
    y, kl = fwd(params, x, k_fwd)
    jax.block_until_ready((y, kl))

    assert y.shape == (batch, output_dim)
    assert kl.shape == ()
    assert bool(jnp.all(jnp.isfinite(y))) and bool(jnp.isfinite(kl))
    print("KERNEL_OK")
</pallas_src>

<mosaic_0001>
module attributes {stable_mosaic.version = 11 : i64} {
  func.func @kernel(%arg0: memref<32x128xf32, #tpu.memory_space<vmem>>, %arg1: memref<32x128xbf16, #tpu.memory_space<vmem>>, %arg2: memref<128x128xbf16, #tpu.memory_space<vmem>>, %arg3: memref<1x128xf32, #tpu.memory_space<vmem>>, %arg4: memref<1x128xf32, #tpu.memory_space<vmem>>, %arg5: memref<1x128xf32, #tpu.memory_space<vmem>>, %arg6: memref<1x128xf32, #tpu.memory_space<vmem>>, %arg7: memref<1x128xf32, #tpu.memory_space<vmem>>, %arg8: memref<1x128xf32, #tpu.memory_space<vmem>>, %arg9: memref<1x128xf32, #tpu.memory_space<vmem>>, %arg10: memref<32x128xbf16, #tpu.memory_space<vmem>>, %arg11: memref<128x128xbf16, #tpu.memory_space<vmem>>, %arg12: memref<1x128xf32, #tpu.memory_space<vmem>>, %arg13: memref<32x128xbf16, #tpu.memory_space<vmem>>, %arg14: memref<128x128xbf16, #tpu.memory_space<vmem>>, %arg15: memref<1x128xf32, #tpu.memory_space<vmem>>, %arg16: memref<32x128xbf16, #tpu.memory_space<vmem>>, %arg17: memref<128x128xbf16, #tpu.memory_space<vmem>>, %arg18: memref<1x128xf32, #tpu.memory_space<vmem>>, %arg19: memref<1x128xf32, #tpu.memory_space<vmem>>, %arg20: memref<1x128xf32, #tpu.memory_space<vmem>>, %arg21: memref<32x128xbf16, #tpu.memory_space<vmem>>, %arg22: memref<128x128xbf16, #tpu.memory_space<vmem>>, %arg23: memref<1x128xf32, #tpu.memory_space<vmem>>, %arg24: memref<32x128xf32, #tpu.memory_space<vmem>>) attributes {dimension_semantics = [], scalar_prefetch = 0 : i64, scratch_operands = 0 : i64, tpu.core_type = #tpu.core_type<tc>} {
    %c0 = arith.constant 0 : index
    %c0_0 = arith.constant 0 : index
    %0 = vector.load %arg0[%c0, %c0_0] : memref<32x128xf32, #tpu.memory_space<vmem>>, vector<32x128xf32>
    %1 = arith.truncf %0 : vector<32x128xf32> to vector<32x128xbf16>
    %c0_1 = arith.constant 0 : index
    %c0_2 = arith.constant 0 : index
    %2 = vector.load %arg1[%c0_1, %c0_2] : memref<32x128xbf16, #tpu.memory_space<vmem>>, vector<32x128xbf16>
    %3 = arith.mulf %1, %2 : vector<32x128xbf16>
    %c0_3 = arith.constant 0 : index
    %c0_4 = arith.constant 0 : index
    %4 = vector.load %arg2[%c0_3, %c0_4] : memref<128x128xbf16, #tpu.memory_space<vmem>>, vector<128x128xbf16>
    %cst = arith.constant dense<0.000000e+00> : vector<32x128xf32>
    %5 = tpu.matmul %3, %4, %cst {dimension_numbers = #tpu.dot_dimension_numbers<[1], [0], [0], [1], [0, 0, 1, 1], [], []>} : vector<32x128xbf16>, vector<128x128xbf16>, vector<32x128xf32> -> vector<32x128xf32>
    %c0_5 = arith.constant 0 : index
    %c0_6 = arith.constant 0 : index
    %6 = vector.load %arg3[%c0_5, %c0_6] : memref<1x128xf32, #tpu.memory_space<vmem>>, vector<1x128xf32>
    %7 = vector.broadcast %6 : vector<1x128xf32> to vector<32x128xf32>
    %8 = arith.addf %5, %7 : vector<32x128xf32>
    %cst_7 = arith.constant dense<0.000000e+00> : vector<128xf32>
    %9 = vector.multi_reduction <add>, %8, %cst_7 [0] : vector<32x128xf32> to vector<128xf32>
    %10 = vector.shape_cast %9 : vector<128xf32> to vector<1x128xf32>
    %cst_8 = arith.constant 3.200000e+01 : f32
    %11 = vector.broadcast %cst_8 : f32 to vector<1x128xf32>
    %12 = arith.divf %10, %11 : vector<1x128xf32>
    %13 = arith.mulf %8, %8 : vector<32x128xf32>
    %cst_9 = arith.constant dense<0.000000e+00> : vector<128xf32>
    %14 = vector.multi_reduction <add>, %13, %cst_9 [0] : vector<32x128xf32> to vector<128xf32>
    %15 = vector.shape_cast %14 : vector<128xf32> to vector<1x128xf32>
    %cst_10 = arith.constant 3.200000e+01 : f32
    %16 = vector.broadcast %cst_10 : f32 to vector<1x128xf32>
    %17 = arith.divf %15, %16 : vector<1x128xf32>
    %18 = arith.mulf %12, %12 : vector<1x128xf32>
    %19 = arith.subf %17, %18 : vector<1x128xf32>
    %c0_11 = arith.constant 0 : index
    %c0_12 = arith.constant 0 : index
    %20 = vector.load %arg4[%c0_11, %c0_12] : memref<1x128xf32, #tpu.memory_space<vmem>>, vector<1x128xf32>
    %cst_13 = arith.constant 9.99999974E-6 : f32
    %21 = vector.broadcast %cst_13 : f32 to vector<1x128xf32>
    %22 = arith.addf %19, %21 : vector<1x128xf32>
    %23 = math.rsqrt %22 : vector<1x128xf32>
    %24 = arith.mulf %20, %23 : vector<1x128xf32>
    %c0_14 = arith.constant 0 : index
    %c0_15 = arith.constant 0 : index
    %25 = vector.load %arg5[%c0_14, %c0_15] : memref<1x128xf32, #tpu.memory_space<vmem>>, vector<1x128xf32>
    %26 = arith.mulf %12, %24 : vector<1x128xf32>
    %27 = arith.subf %25, %26 : vector<1x128xf32>
    %28 = vector.broadcast %24 : vector<1x128xf32> to vector<32x128xf32>
    %29 = arith.mulf %8, %28 : vector<32x128xf32>
    %30 = vector.broadcast %27 : vector<1x128xf32> to vector<32x128xf32>
    %31 = arith.addf %29, %30 : vector<32x128xf32>
    %cst_16 = arith.constant 0.000000e+00 : f32
    %32 = vector.broadcast %cst_16 : f32 to vector<32x128xf32>
    %33 = arith.maximumf %31, %32 : vector<32x128xf32>
    %cst_17 = arith.constant dense<0.000000e+00> : vector<128xf32>
    %34 = vector.multi_reduction <add>, %33, %cst_17 [0] : vector<32x128xf32> to vector<128xf32>
    %35 = vector.shape_cast %34 : vector<128xf32> to vector<1x128xf32>
    %cst_18 = arith.constant 3.200000e+01 : f32
    %36 = vector.broadcast %cst_18 : f32 to vector<1x128xf32>
    %37 = arith.divf %35, %36 : vector<1x128xf32>
    %38 = arith.mulf %33, %33 : vector<32x128xf32>
    %cst_19 = arith.constant dense<0.000000e+00> : vector<128xf32>
    %39 = vector.multi_reduction <add>, %38, %cst_19 [0] : vector<32x128xf32> to vector<128xf32>
    %40 = vector.shape_cast %39 : vector<128xf32> to vector<1x128xf32>
    %cst_20 = arith.constant 3.200000e+01 : f32
    %41 = vector.broadcast %cst_20 : f32 to vector<1x128xf32>
    %42 = arith.divf %40, %41 : vector<1x128xf32>
    %43 = arith.mulf %37, %37 : vector<1x128xf32>
    %44 = arith.subf %42, %43 : vector<1x128xf32>
    %c0_21 = arith.constant 0 : index
    %c0_22 = arith.constant 0 : index
    %45 = vector.load %arg6[%c0_21, %c0_22] : memref<1x128xf32, #tpu.memory_space<vmem>>, vector<1x128xf32>
    %cst_23 = arith.constant 9.99999974E-6 : f32
    %46 = vector.broadcast %cst_23 : f32 to vector<1x128xf32>
    %47 = arith.addf %44, %46 : vector<1x128xf32>
    %48 = math.rsqrt %47 : vector<1x128xf32>
    %49 = arith.mulf %45, %48 : vector<1x128xf32>
    %c0_24 = arith.constant 0 : index
    %c0_25 = arith.constant 0 : index
    %50 = vector.load %arg7[%c0_24, %c0_25] : memref<1x128xf32, #tpu.memory_space<vmem>>, vector<1x128xf32>
    %51 = arith.mulf %37, %49 : vector<1x128xf32>
    %52 = arith.subf %50, %51 : vector<1x128xf32>
    %53 = vector.broadcast %49 : vector<1x128xf32> to vector<32x128xf32>
    %54 = arith.mulf %33, %53 : vector<32x128xf32>
    %55 = vector.broadcast %52 : vector<1x128xf32> to vector<32x128xf32>
    %56 = arith.addf %54, %55 : vector<32x128xf32>
    %cst_26 = arith.constant 0.000000e+00 : f32
    %57 = vector.broadcast %cst_26 : f32 to vector<32x128xf32>
    %58 = arith.maximumf %56, %57 : vector<32x128xf32>
    %59 = arith.truncf %58 : vector<32x128xf32> to vector<32x128xbf16>
    %c0_27 = arith.constant 0 : index
    %c0_28 = arith.constant 0 : index
    %60 = vector.load %arg10[%c0_27, %c0_28] : memref<32x128xbf16, #tpu.memory_space<vmem>>, vector<32x128xbf16>
    %61 = arith.mulf %59, %60 : vector<32x128xbf16>
    %c0_29 = arith.constant 0 : index
    %c0_30 = arith.constant 0 : index
    %62 = vector.load %arg11[%c0_29, %c0_30] : memref<128x128xbf16, #tpu.memory_space<vmem>>, vector<128x128xbf16>
    %cst_31 = arith.constant dense<0.000000e+00> : vector<32x128xf32>
    %63 = tpu.matmul %61, %62, %cst_31 {dimension_numbers = #tpu.dot_dimension_numbers<[1], [0], [0], [1], [0, 0, 1, 1], [], []>} : vector<32x128xbf16>, vector<128x128xbf16>, vector<32x128xf32> -> vector<32x128xf32>
    %c0_32 = arith.constant 0 : index
    %c0_33 = arith.constant 0 : index
    %64 = vector.load %arg12[%c0_32, %c0_33] : memref<1x128xf32, #tpu.memory_space<vmem>>, vector<1x128xf32>
    %65 = vector.broadcast %64 : vector<1x128xf32> to vector<32x128xf32>
    %66 = arith.addf %63, %65 : vector<32x128xf32>
    %cst_34 = arith.constant dense<0.000000e+00> : vector<128xf32>
    %67 = vector.multi_reduction <add>, %66, %cst_34 [0] : vector<32x128xf32> to vector<128xf32>
    %68 = vector.shape_cast %67 : vector<128xf32> to vector<1x128xf32>
    %cst_35 = arith.constant 3.200000e+01 : f32
    %69 = vector.broadcast %cst_35 : f32 to vector<1x128xf32>
    %70 = arith.divf %68, %69 : vector<1x128xf32>
    %71 = arith.mulf %66, %66 : vector<32x128xf32>
    %cst_36 = arith.constant dense<0.000000e+00> : vector<128xf32>
    %72 = vector.multi_reduction <add>, %71, %cst_36 [0] : vector<32x128xf32> to vector<128xf32>
    %73 = vector.shape_cast %72 : vector<128xf32> to vector<1x128xf32>
    %cst_37 = arith.constant 3.200000e+01 : f32
    %74 = vector.broadcast %cst_37 : f32 to vector<1x128xf32>
    %75 = arith.divf %73, %74 : vector<1x128xf32>
    %76 = arith.mulf %70, %70 : vector<1x128xf32>
    %77 = arith.subf %75, %76 : vector<1x128xf32>
    %c0_38 = arith.constant 0 : index
    %c0_39 = arith.constant 0 : index
    %78 = vector.load %arg8[%c0_38, %c0_39] : memref<1x128xf32, #tpu.memory_space<vmem>>, vector<1x128xf32>
    %cst_40 = arith.constant 9.99999974E-6 : f32
    %79 = vector.broadcast %cst_40 : f32 to vector<1x128xf32>
    %80 = arith.addf %77, %79 : vector<1x128xf32>
    %81 = math.rsqrt %80 : vector<1x128xf32>
    %82 = arith.mulf %78, %81 : vector<1x128xf32>
    %c0_41 = arith.constant 0 : index
    %c0_42 = arith.constant 0 : index
    %83 = vector.load %arg9[%c0_41, %c0_42] : memref<1x128xf32, #tpu.memory_space<vmem>>, vector<1x128xf32>
    %84 = arith.mulf %70, %82 : vector<1x128xf32>
    %85 = arith.subf %83, %84 : vector<1x128xf32>
    %86 = vector.broadcast %82 : vector<1x128xf32> to vector<32x128xf32>
    %87 = arith.mulf %66, %86 : vector<32x128xf32>
    %88 = vector.broadcast %85 : vector<1x128xf32> to vector<32x128xf32>
    %89 = arith.addf %87, %88 : vector<32x128xf32>
    %cst_43 = arith.constant 0.000000e+00 : f32
    %90 = vector.broadcast %cst_43 : f32 to vector<32x128xf32>
    %91 = arith.maximumf %89, %90 : vector<32x128xf32>
    %92 = arith.truncf %91 : vector<32x128xf32> to vector<32x128xbf16>
    %c0_44 = arith.constant 0 : index
    %c0_45 = arith.constant 0 : index
    %93 = vector.load %arg13[%c0_44, %c0_45] : memref<32x128xbf16, #tpu.memory_space<vmem>>, vector<32x128xbf16>
    %94 = arith.mulf %92, %93 : vector<32x128xbf16>
    %c0_46 = arith.constant 0 : index
    %c0_47 = arith.constant 0 : index
    %95 = vector.load %arg14[%c0_46, %c0_47] : memref<128x128xbf16, #tpu.memory_space<vmem>>, vector<128x128xbf16>
    %cst_48 = arith.constant dense<0.000000e+00> : vector<32x128xf32>
    %96 = tpu.matmul %94, %95, %cst_48 {dimension_numbers = #tpu.dot_dimension_numbers<[1], [0], [0], [1], [0, 0, 1, 1], [], []>} : vector<32x128xbf16>, vector<128x128xbf16>, vector<32x128xf32> -> vector<32x128xf32>
    %c0_49 = arith.constant 0 : index
    %c0_50 = arith.constant 0 : index
    %97 = vector.load %arg15[%c0_49, %c0_50] : memref<1x128xf32, #tpu.memory_space<vmem>>, vector<1x128xf32>
    %98 = vector.broadcast %97 : vector<1x128xf32> to vector<32x128xf32>
    %99 = arith.addf %96, %98 : vector<32x128xf32>
    %100 = arith.addf %99, %33 : vector<32x128xf32>
    %101 = arith.truncf %100 : vector<32x128xf32> to vector<32x128xbf16>
    %c0_51 = arith.constant 0 : index
    %c0_52 = arith.constant 0 : index
    %102 = vector.load %arg16[%c0_51, %c0_52] : memref<32x128xbf16, #tpu.memory_space<vmem>>, vector<32x128xbf16>
    %103 = arith.mulf %101, %102 : vector<32x128xbf16>
    %c0_53 = arith.constant 0 : index
    %c0_54 = arith.constant 0 : index
    %104 = vector.load %arg17[%c0_53, %c0_54] : memref<128x128xbf16, #tpu.memory_space<vmem>>, vector<128x128xbf16>
    %cst_55 = arith.constant dense<0.000000e+00> : vector<32x128xf32>
    %105 = tpu.matmul %103, %104, %cst_55 {dimension_numbers = #tpu.dot_dimension_numbers<[1], [0], [0], [1], [0, 0, 1, 1], [], []>} : vector<32x128xbf16>, vector<128x128xbf16>, vector<32x128xf32> -> vector<32x128xf32>
    %c0_56 = arith.constant 0 : index
    %c0_57 = arith.constant 0 : index
    %106 = vector.load %arg18[%c0_56, %c0_57] : memref<1x128xf32, #tpu.memory_space<vmem>>, vector<1x128xf32>
    %107 = vector.broadcast %106 : vector<1x128xf32> to vector<32x128xf32>
    %108 = arith.addf %105, %107 : vector<32x128xf32>
    %cst_58 = arith.constant dense<0.000000e+00> : vector<128xf32>
    %109 = vector.multi_reduction <add>, %108, %cst_58 [0] : vector<32x128xf32> to vector<128xf32>
    %110 = vector.shape_cast %109 : vector<128xf32> to vector<1x128xf32>
    %cst_59 = arith.constant 3.200000e+01 : f32
    %111 = vector.broadcast %cst_59 : f32 to vector<1x128xf32>
    %112 = arith.divf %110, %111 : vector<1x128xf32>
    %113 = arith.mulf %108, %108 : vector<32x128xf32>
    %cst_60 = arith.constant dense<0.000000e+00> : vector<128xf32>
    %114 = vector.multi_reduction <add>, %113, %cst_60 [0] : vector<32x128xf32> to vector<128xf32>
    %115 = vector.shape_cast %114 : vector<128xf32> to vector<1x128xf32>
    %cst_61 = arith.constant 3.200000e+01 : f32
    %116 = vector.broadcast %cst_61 : f32 to vector<1x128xf32>
    %117 = arith.divf %115, %116 : vector<1x128xf32>
    %118 = arith.mulf %112, %112 : vector<1x128xf32>
    %119 = arith.subf %117, %118 : vector<1x128xf32>
    %c0_62 = arith.constant 0 : index
    %c0_63 = arith.constant 0 : index
    %120 = vector.load %arg19[%c0_62, %c0_63] : memref<1x128xf32, #tpu.memory_space<vmem>>, vector<1x128xf32>
    %cst_64 = arith.constant 9.99999974E-6 : f32
    %121 = vector.broadcast %cst_64 : f32 to vector<1x128xf32>
    %122 = arith.addf %119, %121 : vector<1x128xf32>
    %123 = math.rsqrt %122 : vector<1x128xf32>
    %124 = arith.mulf %120, %123 : vector<1x128xf32>
    %c0_65 = arith.constant 0 : index
    %c0_66 = arith.constant 0 : index
    %125 = vector.load %arg20[%c0_65, %c0_66] : memref<1x128xf32, #tpu.memory_space<vmem>>, vector<1x128xf32>
    %126 = arith.mulf %112, %124 : vector<1x128xf32>
    %127 = arith.subf %125, %126 : vector<1x128xf32>
    %128 = vector.broadcast %124 : vector<1x128xf32> to vector<32x128xf32>
    %129 = arith.mulf %108, %128 : vector<32x128xf32>
    %130 = vector.broadcast %127 : vector<1x128xf32> to vector<32x128xf32>
    %131 = arith.addf %129, %130 : vector<32x128xf32>
    %cst_67 = arith.constant 0.000000e+00 : f32
    %132 = vector.broadcast %cst_67 : f32 to vector<32x128xf32>
    %133 = arith.maximumf %131, %132 : vector<32x128xf32>
    %134 = arith.truncf %133 : vector<32x128xf32> to vector<32x128xbf16>
    %c0_68 = arith.constant 0 : index
    %c0_69 = arith.constant 0 : index
    %135 = vector.load %arg21[%c0_68, %c0_69] : memref<32x128xbf16, #tpu.memory_space<vmem>>, vector<32x128xbf16>
    %136 = arith.mulf %134, %135 : vector<32x128xbf16>
    %c0_70 = arith.constant 0 : index
    %c0_71 = arith.constant 0 : index
    %137 = vector.load %arg22[%c0_70, %c0_71] : memref<128x128xbf16, #tpu.memory_space<vmem>>, vector<128x128xbf16>
    %cst_72 = arith.constant dense<0.000000e+00> : vector<32x128xf32>
    %138 = tpu.matmul %136, %137, %cst_72 {dimension_numbers = #tpu.dot_dimension_numbers<[1], [0], [0], [1], [0, 0, 1, 1], [], []>} : vector<32x128xbf16>, vector<128x128xbf16>, vector<32x128xf32> -> vector<32x128xf32>
    %c0_73 = arith.constant 0 : index
    %c0_74 = arith.constant 0 : index
    %139 = vector.load %arg23[%c0_73, %c0_74] : memref<1x128xf32, #tpu.memory_space<vmem>>, vector<1x128xf32>
    %140 = vector.broadcast %139 : vector<1x128xf32> to vector<32x128xf32>
    %141 = arith.addf %138, %140 : vector<32x128xf32>
    %c0_75 = arith.constant 0 : index
    %c0_76 = arith.constant 0 : index
    %142 = vector.load %arg24[%c0_75, %c0_76] : memref<32x128xf32, #tpu.memory_space<vmem>>, vector<32x128xf32>
    tpu.vector_store %arg24[%c0_75, %c0_76], %141 {strides = array<i32>} : memref<32x128xf32, #tpu.memory_space<vmem>>, vector<32x128xf32>,
    return
  }
}

</mosaic_0001>

<llo_original>
// kernel: hbnn_forward.15
$region0: #{hbnn_forward.15}
  #allocation0 [shape = 'u32[]', space=smem, size = 0x4, offset = 0x4, fixed_abs, tag = 'smem constant byte address 0x4 - core index']
  #allocation1 [shape = 'u32[72,128]{1,0:T(1,128)}', space=vmem, size = 0x9000, scoped, tag = 'internal scratch']
  %s0 = inlined_call_operand.vmem [shape: f32[32,128], index: 0, kind: input, shape index: {}]
  %s1 = inlined_call_operand.vmem [shape: bf16[32,128], index: 1, kind: input, shape index: {}]
  %s2 = inlined_call_operand.vmem [shape: bf16[128,128], index: 2, kind: input, shape index: {}]
  %s3 = inlined_call_operand.vmem [shape: f32[1,128], index: 3, kind: input, shape index: {}]
  %s4 = inlined_call_operand.vmem [shape: f32[1,128], index: 4, kind: input, shape index: {}]
  %s5 = inlined_call_operand.vmem [shape: f32[1,128], index: 5, kind: input, shape index: {}]
  %s6 = inlined_call_operand.vmem [shape: f32[1,128], index: 6, kind: input, shape index: {}]
  %s7 = inlined_call_operand.vmem [shape: f32[1,128], index: 7, kind: input, shape index: {}]
  %s8 = inlined_call_operand.vmem [shape: f32[1,128], index: 8, kind: input, shape index: {}]
  %s9 = inlined_call_operand.vmem [shape: f32[1,128], index: 9, kind: input, shape index: {}]
  %s10 = inlined_call_operand.vmem [shape: bf16[32,128], index: 10, kind: input, shape index: {}]
  %s11 = inlined_call_operand.vmem [shape: bf16[128,128], index: 11, kind: input, shape index: {}]
  %s12 = inlined_call_operand.vmem [shape: f32[1,128], index: 12, kind: input, shape index: {}]
  %s13 = inlined_call_operand.vmem [shape: bf16[32,128], index: 13, kind: input, shape index: {}]
  %s14 = inlined_call_operand.vmem [shape: bf16[128,128], index: 14, kind: input, shape index: {}]
  %s15 = inlined_call_operand.vmem [shape: f32[1,128], index: 15, kind: input, shape index: {}]
  %s16 = inlined_call_operand.vmem [shape: bf16[32,128], index: 16, kind: input, shape index: {}]
  %s17 = inlined_call_operand.vmem [shape: bf16[128,128], index: 17, kind: input, shape index: {}]
  %s18 = inlined_call_operand.vmem [shape: f32[1,128], index: 18, kind: input, shape index: {}]
  %s19 = inlined_call_operand.vmem [shape: f32[1,128], index: 19, kind: input, shape index: {}]
  %s20 = inlined_call_operand.vmem [shape: f32[1,128], index: 20, kind: input, shape index: {}]
  %s21 = inlined_call_operand.vmem [shape: bf16[32,128], index: 21, kind: input, shape index: {}]
  %s22 = inlined_call_operand.vmem [shape: bf16[128,128], index: 22, kind: input, shape index: {}]
  %s23 = inlined_call_operand.vmem [shape: f32[1,128], index: 23, kind: input, shape index: {}]
  %s24 = inlined_call_operand.vmem [shape: f32[32,128], index: 24, kind: output, shape index: {}]
  %s25 = sld [smem:[#allocation0]]
  $region106: #{hbnn_forward.15} parent=0
    _
  %s27 = ssub.s32 1, %s25
  %s28 = scalar_select 0, %s27, %s25
  // Predicated region
  $region2: #{hbnn_forward.15} parent=0 // pred_check
    _
  $region3: #{hbnn_forward.15} parent=0 // pred_check_branch
    %30 = sbr.rel (0) target = $region5
  $region4: #{hbnn_forward.15} parent=0 // pred_region
    _
  $region5: #{hbnn_forward.15} parent=0 // pred_fallthru
    _
  // Predicated region
  $region6: #{hbnn_forward.15} parent=0 // pred_check
    _
  $region7: #{hbnn_forward.15} parent=0 // pred_check_branch
    %32 = sbr.rel (0) target = $region9
  $region8: #{hbnn_forward.15} parent=0 // pred_region
    _
  $region9: #{hbnn_forward.15} parent=0 // pred_fallthru
    _
  // Predicated region
  $region10: #{hbnn_forward.15} parent=0 // pred_check
    _
  $region11: #{hbnn_forward.15} parent=0 // pred_check_branch
    %34 = sbr.rel (0) target = $region13
  $region12: #{hbnn_forward.15} parent=0 // pred_region
    _
  $region13: #{hbnn_forward.15} parent=0 // pred_fallthru
    _
  // Predicated region
  $region14: #{hbnn_forward.15} parent=0 // pred_check
    _
  $region15: #{hbnn_forward.15} parent=0 // pred_check_branch
    %36 = sbr.rel (0) target = $region17
  $region16: #{hbnn_forward.15} parent=0 // pred_region
    _
  $region17: #{hbnn_forward.15} parent=0 // pred_fallthru
    _
  // Predicated region
  $region18: #{hbnn_forward.15} parent=0 // pred_check
    _
  $region19: #{hbnn_forward.15} parent=0 // pred_check_branch
    %38 = sbr.rel (0) target = $region21
  $region20: #{hbnn_forward.15} parent=0 // pred_region
    _
  $region21: #{hbnn_forward.15} parent=0 // pred_fallthru
    _
  // Predicated region
  $region22: #{hbnn_forward.15} parent=0 // pred_check
    _
  $region23: #{hbnn_forward.15} parent=0 // pred_check_branch
    %40 = sbr.rel (0) target = $region25
  $region24: #{hbnn_forward.15} parent=0 // pred_region
    _
  $region25: #{hbnn_forward.15} parent=0 // pred_fallthru
    _
  // Predicated region
  $region26: #{hbnn_forward.15} parent=0 // pred_check
    _
  $region27: #{hbnn_forward.15} parent=0 // pred_check_branch
    %42 = sbr.rel (0) target = $region29
  $region28: #{hbnn_forward.15} parent=0 // pred_region
    _
  $region29: #{hbnn_forward.15} parent=0 // pred_fallthru
    _
  // Predicated region
  $region30: #{hbnn_forward.15} parent=0 // pred_check
    _
  $region31: #{hbnn_forward.15} parent=0 // pred_check_branch
    %44 = sbr.rel (0) target = $region33
  $region32: #{hbnn_forward.15} parent=0 // pred_region
    _
  $region33: #{hbnn_forward.15} parent=0 // pred_fallthru
    _
  // Predicated region
  $region34: #{hbnn_forward.15} parent=0 // pred_check
    _
  $region35: #{hbnn_forward.15} parent=0 // pred_check_branch
    %46 = sbr.rel (0) target = $region37
  $region36: #{hbnn_forward.15} parent=0 // pred_region
    _
  $region37: #{hbnn_forward.15} parent=0 // pred_fallthru
    _
  // Predicated region
  $region38: #{hbnn_forward.15} parent=0 // pred_check
    _
  $region39: #{hbnn_forward.15} parent=0 // pred_check_branch
    %48 = sbr.rel (0) target = $region41
  $region40: #{hbnn_forward.15} parent=0 // pred_region
    _
  $region41: #{hbnn_forward.15} parent=0 // pred_fallthru
    _
  // Predicated region
  $region42: #{hbnn_forward.15} parent=0 // pred_check
    _
  $region43: #{hbnn_forward.15} parent=0 // pred_check_branch
    %50 = sbr.rel (0) target = $region45
  $region44: #{hbnn_forward.15} parent=0 // pred_region
    _
  $region45: #{hbnn_forward.15} parent=0 // pred_fallthru
    _
  // Predicated region
  $region46: #{hbnn_forward.15} parent=0 // pred_check
    _
  $region47: #{hbnn_forward.15} parent=0 // pred_check_branch
    %52 = sbr.rel (0) target = $region49
  $region48: #{hbnn_forward.15} parent=0 // pred_region
    _
  $region49: #{hbnn_forward.15} parent=0 // pred_fallthru
    _
  // Predicated region
  $region50: #{hbnn_forward.15} parent=0 // pred_check
    _
  $region51: #{hbnn_forward.15} parent=0 // pred_check_branch
    %54 = sbr.rel (0) target = $region53
  $region52: #{hbnn_forward.15} parent=0 // pred_region
    _
  $region53: #{hbnn_forward.15} parent=0 // pred_fallthru
    _
  // Predicated region
  $region54: #{hbnn_forward.15} parent=0 // pred_check
    _
  $region55: #{hbnn_forward.15} parent=0 // pred_check_branch
    %56 = sbr.rel (0) target = $region57
  $region56: #{hbnn_forward.15} parent=0 // pred_region
    _
  $region57: #{hbnn_forward.15} parent=0 // pred_fallthru
    _
  // Predicated region
  $region58: #{hbnn_forward.15} parent=0 // pred_check
    _
  $region59: #{hbnn_forward.15} parent=0 // pred_check_branch
    %58 = sbr.rel (0) target = $region61
  $region60: #{hbnn_forward.15} parent=0 // pred_region
    _
  $region61: #{hbnn_forward.15} parent=0 // pred_fallthru
    _
  // Predicated region
  $region62: #{hbnn_forward.15} parent=0 // pred_check
    _
  $region63: #{hbnn_forward.15} parent=0 // pred_check_branch
    %60 = sbr.rel (0) target = $region65
  $region64: #{hbnn_forward.15} parent=0 // pred_region
    _
  $region65: #{hbnn_forward.15} parent=0 // pred_fallthru
    _
  // Predicated region
  $region66: #{hbnn_forward.15} parent=0 // pred_check
    _
  $region67: #{hbnn_forward.15} parent=0 // pred_check_branch
    %62 = sbr.rel (0) target = $region69
  $region68: #{hbnn_forward.15} parent=0 // pred_region
    _
  $region69: #{hbnn_forward.15} parent=0 // pred_fallthru
    _
  // Predicated region
  $region70: #{hbnn_forward.15} parent=0 // pred_check
    _
  $region71: #{hbnn_forward.15} parent=0 // pred_check_branch
    %64 = sbr.rel (0) target = $region73
  $region72: #{hbnn_forward.15} parent=0 // pred_region
    _
  $region73: #{hbnn_forward.15} parent=0 // pred_fallthru
    _
  // Predicated region
  $region74: #{hbnn_forward.15} parent=0 // pred_check
    _
  $region75: #{hbnn_forward.15} parent=0 // pred_check_branch
    %66 = sbr.rel (0) target = $region77
  $region76: #{hbnn_forward.15} parent=0 // pred_region
    _
  $region77: #{hbnn_forward.15} parent=0 // pred_fallthru
    _
  // Predicated region
  $region78: #{hbnn_forward.15} parent=0 // pred_check
    _
  $region79: #{hbnn_forward.15} parent=0 // pred_check_branch
    %68 = sbr.rel (0) target = $region81
  $region80: #{hbnn_forward.15} parent=0 // pred_region
    _
  $region81: #{hbnn_forward.15} parent=0 // pred_fallthru
    _
  // Predicated region
  $region82: #{hbnn_forward.15} parent=0 // pred_check
    _
  $region83: #{hbnn_forward.15} parent=0 // pred_check_branch
    %70 = sbr.rel (0) target = $region85
  $region84: #{hbnn_forward.15} parent=0 // pred_region
    _
  $region85: #{hbnn_forward.15} parent=0 // pred_fallthru
    _
  // Predicated region
  $region86: #{hbnn_forward.15} parent=0 // pred_check
    _
  $region87: #{hbnn_forward.15} parent=0 // pred_check_branch
    %72 = sbr.rel (0) target = $region89
  $region88: #{hbnn_forward.15} parent=0 // pred_region
    _
  $region89: #{hbnn_forward.15} parent=0 // pred_fallthru
    _
  // Predicated region
  $region90: #{hbnn_forward.15} parent=0 // pred_check
    _
  $region91: #{hbnn_forward.15} parent=0 // pred_check_branch
    %74 = sbr.rel (0) target = $region93
  $region92: #{hbnn_forward.15} parent=0 // pred_region
    _
  $region93: #{hbnn_forward.15} parent=0 // pred_fallthru
    _
  // Predicated region
  $region94: #{hbnn_forward.15} parent=0 // pred_check
    _
  $region95: #{hbnn_forward.15} parent=0 // pred_check_branch
    %76 = sbr.rel (0) target = $region97
  $region96: #{hbnn_forward.15} parent=0 // pred_region
    _
  $region97: #{hbnn_forward.15} parent=0 // pred_fallthru
    _
  %v77 = vld [vmem:[%s0] sm:$0xff]
  %v78 = vld [vmem:[%s0 + $0x8] sm:$0xff]
  %v79 = vld [vmem:[%s0 + $0x10] sm:$0xff]
  %v80 = vld [vmem:[%s0 + $0x18] sm:$0xff]
  %v81 = vpack.c.bf16 %v77, %v77
  %v82 = vpack.c.bf16 %v78, %v78
  %v83 = vpack.c.bf16 %v79, %v79
  %v84 = vpack.c.bf16 %v80, %v80
  %v85 = vld [vmem:[%s1] sm:$0xf]
  %v86 = vld [vmem:[%s1 + $0x4] sm:$0xf]
  %v87 = vld [vmem:[%s1 + $0x8] sm:$0xf]
  %v88 = vld [vmem:[%s1 + $0xc] sm:$0xf]
  %v89 = vunpack.c.l.bf16 %v81
  %v90 = vunpack.c.l.bf16 %v82
  %v91 = vunpack.c.l.bf16 %v83
  %v92 = vunpack.c.l.bf16 %v84
  %v93 = vunpack.c.l.bf16 %v85
  %v94 = vunpack.c.l.bf16 %v86
  %v95 = vunpack.c.l.bf16 %v87
  %v96 = vunpack.c.l.bf16 %v88
  %v97 = vmul.f32 %v89, %v93
  %v98 = vmul.f32 %v90, %v94
  %v99 = vmul.f32 %v91, %v95
  %v100 = vmul.f32 %v92, %v96
  %v101 = vpack.c.bf16 %v98, %v97
  %v102 = vpack.c.bf16 %v100, %v99
  %v103 = vld [vmem:[%s2] sm:$0xf]
  %v104 = vld [vmem:[%s2 + $0x4] sm:$0xf]
  %v105 = vld [vmem:[%s2 + $0x8] sm:$0xf]
  %v106 = vld [vmem:[%s2 + $0xc] sm:$0xf]
  %v107 = vld [vmem:[%s2 + $0x10] sm:$0xf]
  %v108 = vld [vmem:[%s2 + $0x14] sm:$0xf]
  %v109 = vld [vmem:[%s2 + $0x18] sm:$0xf]
  %v110 = vld [vmem:[%s2 + $0x1c] sm:$0xf]
  %v111 = vld [vmem:[%s2 + $0x20] sm:$0xf]
  %v112 = vld [vmem:[%s2 + $0x24] sm:$0xf]
  %v113 = vld [vmem:[%s2 + $0x28] sm:$0xf]
  %v114 = vld [vmem:[%s2 + $0x2c] sm:$0xf]
  %v115 = vld [vmem:[%s2 + $0x30] sm:$0xf]
  %v116 = vld [vmem:[%s2 + $0x34] sm:$0xf]
  %v117 = vld [vmem:[%s2 + $0x38] sm:$0xf]
  %v118 = vld [vmem:[%s2 + $0x3c] sm:$0xf]
  %v119 = vld [vmem:[%s3] sm:$0x1]
  %v121 = vperm.slane %v119, 0
  %v139 = vunpack.c.l.b16 %v103
  %v140 = vunpack.c.l.b16 %v104
  %v141 = vunpack.c.l.b16 %v105
  %v142 = vunpack.c.l.b16 %v106
  %v143 = vunpack.c.l.b16 %v107
  %v144 = vunpack.c.l.b16 %v108
  %v145 = vunpack.c.l.b16 %v109
  %v146 = vunpack.c.l.b16 %v110
  %v147 = vunpack.c.l.b16 %v111
  %v148 = vunpack.c.l.b16 %v112
  %v149 = vunpack.c.l.b16 %v113
  %v150 = vunpack.c.l.b16 %v114
  %v151 = vunpack.c.l.b16 %v115
  %v152 = vunpack.c.l.b16 %v116
  %v153 = vunpack.c.l.b16 %v117
  %v154 = vunpack.c.l.b16 %v118
  %v155 = vpack.c.b16 %v140, %v139
  %v156 = vpack.c.b16 %v142, %v141
  %v157 = vpack.c.b16 %v144, %v143
  %v158 = vpack.c.b16 %v146, %v145
  %v159 = vpack.c.b16 %v148, %v147
  %v160 = vpack.c.b16 %v150, %v149
  %v161 = vpack.c.b16 %v152, %v151
  %v162 = vpack.c.b16 %v154, %v153
  %171 = vmatpush.bf16.msra.mxu0 %v162
  %172 = vmatpush.bf16.msra.mxu0 %v161
  %173 = vmatpush.bf16.msra.mxu0 %v160
  %174 = vmatpush.bf16.msra.mxu0 %v159
  %175 = vmatpush.bf16.msra.mxu0 %v158
  %176 = vmatpush.bf16.msra.mxu0 %v157
  %177 = vmatpush.bf16.msra.mxu0 %v156
  %178 = vmatpush.bf16.msra.mxu0 %v155
  %179 = vmatmul.bf16.gmra.mxu0 %v101
  %v180 = vpop.f32.mrf.mxu0
  %v181 = vadd.f32 %v121, %v180
  %v182 = vpop.f32.mrf.mxu0
  %v183 = vadd.f32 %v121, %v182
  %184 = vmatmul.bf16.gmra.mxu0 %v102
  %v185 = vpop.f32.mrf.mxu0
  %v186 = vadd.f32 %v121, %v185
  %v187 = vpop.f32.mrf.mxu0
  %v188 = vadd.f32 %v121, %v187
  %189 = vdwg.mxu0
  %v190 = vadd.f32 %v181, %v183
  %v191 = vadd.f32 %v190, %v186
  %v192 = vadd.f32 %v191, %v188
  %v193 = vrot.slane %v192, 4
  %v194 = vadd.f32 %v192, %v193
  %v195 = vrot.slane %v194, 2
  %v196 = vadd.f32 %v194, %v195
  %v197 = vrot.slane %v196, 1
  %v198 = vadd.f32 %v196, %v197
  %v199 = vrcp.pop 32.0
  %v200 = vmul.f32 32.0, %v199
  %v201 = vsub.f32 1.0, %v200
  %v202 = vmul.f32 %v199, %v201
  %v203 = vadd.f32 %v199, %v202
  %vm204 = vweird.f32 %v199
  %v205 = vsel %vm204, %v199, %v203
  %v206 = vmul.f32 %v198, %v205
  %v207 = vmul.f32 %v181, %v181
  %v208 = vmul.f32 %v183, %v183
  %v209 = vmul.f32 %v186, %v186
  %v210 = vmul.f32 %v188, %v188
  %v211 = vadd.f32 %v207, %v208
  %v212 = vadd.f32 %v211, %v209
  %v213 = vadd.f32 %v212, %v210
  %v214 = vrot.slane %v213, 4
  %v215 = vadd.f32 %v213, %v214
  %v216 = vrot.slane %v215, 2
  %v217 = vadd.f32 %v215, %v216
  %v218 = vrot.slane %v217, 1
  %v219 = vadd.f32 %v217, %v218
  %v220 = vmul.f32 %v219, %v205
  %v221 = vmul.f32 %v206, %v206
  %v222 = vsub.f32 %v220, %v221
  %v223 = vld [vmem:[%s4] sm:$0x1]
  %v224 = vadd.f32 %v222, 1e-05
  %v225 = vrsqrt.pop %v224
  %v226 = vmul.f32 %v225, %v224
  %v227 = vmul.f32 %v226, %v225
  %v228 = vmul.f32 0.5, %v227
  %v229 = vsub.f32 1.5, %v228
  %v230 = vmul.f32 %v225, %v229
  %vm231 = vweird.f32 %v224
  %vm232 = vweird.f32 %v225
  %vm233 = vmor %vm231, %vm232
  %v234 = vsel %vm233, %v225, %v230
  %v235 = vmul.f32 %v223, %v234
  %v236 = vld [vmem:[%s5] sm:$0x1]
  %v237 = vmul.f32 %v206, %v235
  %v238 = vsub.f32 %v236, %v237
  %v240 = vperm.slane %v235, 0
  %v242 = vmul.f32 %v181, %v240
  %v243 = vmul.f32 %v183, %v240
  %v244 = vmul.f32 %v186, %v240
  %v245 = vmul.f32 %v188, %v240
  %v247 = vperm.slane %v238, 0
  %v249 = vadd.f32 %v242, %v247
  %v250 = vadd.f32 %v243, %v247
  %v251 = vadd.f32 %v244, %v247
  %v252 = vadd.f32 %v245, %v247
  %v253 = vmax.f32 %v249, 0.0
  %v254 = vmax.f32 %v250, 0.0
  %v255 = vmax.f32 %v251, 0.0
  %v256 = vmax.f32 %v252, 0.0
  %v257 = vadd.f32 %v253, %v254
  %v258 = vadd.f32 %v257, %v255
  %v259 = vadd.f32 %v258, %v256
  %v260 = vrot.slane %v259, 4
  %v261 = vadd.f32 %v259, %v260
  %v262 = vrot.slane %v261, 2
  %v263 = vadd.f32 %v261, %v262
  %v264 = vrot.slane %v263, 1
  %v265 = vadd.f32 %v263, %v264
  %v266 = vmul.f32 %v265, %v205
  %v267 = vmul.f32 %v253, %v253
  %v268 = vmul.f32 %v254, %v254
  %v269 = vmul.f32 %v255, %v255
  %v270 = vmul.f32 %v256, %v256
  %v271 = vadd.f32 %v267, %v268
  %v272 = vadd.f32 %v271, %v269
  %v273 = vadd.f32 %v272, %v270
  %v274 = vrot.slane %v273, 4
  %v275 = vadd.f32 %v273, %v274
  %v276 = vrot.slane %v275, 2
  %v277 = vadd.f32 %v275, %v276
  %v278 = vrot.slane %v277, 1
  %v279 = vadd.f32 %v277, %v278
  %v280 = vmul.f32 %v279, %v205
  %v281 = vmul.f32 %v266, %v266
  %v282 = vsub.f32 %v280, %v281
  %v283 = vld [vmem:[%s6] sm:$0x1]
  %v284 = vadd.f32 %v282, 1e-05
  %v285 = vrsqrt.pop %v284
  %v286 = vmul.f32 %v285, %v284
  %v287 = vmul.f32 %v286, %v285
  %v288 = vmul.f32 0.5, %v287
  %v289 = vsub.f32 1.5, %v288
  %v290 = vmul.f32 %v285, %v289
  %vm291 = vweird.f32 %v284
  %vm292 = vweird.f32 %v285
  %vm293 = vmor %vm291, %vm292
  %v294 = vsel %vm293, %v285, %v290
  %v295 = vmul.f32 %v283, %v294
  %v296 = vld [vmem:[%s7] sm:$0x1]
  %v297 = vmul.f32 %v266, %v295
  %v298 = vsub.f32 %v296, %v297
  %v300 = vperm.slane %v295, 0
  %v302 = vmul.f32 %v253, %v300
  %v303 = vmul.f32 %v254, %v300
  %v304 = vmul.f32 %v255, %v300
  %v305 = vmul.f32 %v256, %v300
  %v307 = vperm.slane %v298, 0
  %v309 = vadd.f32 %v302, %v307
  %v310 = vadd.f32 %v303, %v307
  %v311 = vadd.f32 %v304, %v307
  %v312 = vadd.f32 %v305, %v307
  %v313 = vmax.f32 %v309, 0.0
  %v314 = vmax.f32 %v310, 0.0
  %v315 = vmax.f32 %v311, 0.0
  %v316 = vmax.f32 %v312, 0.0
  %v317 = vpack.c.bf16 %v313, %v313
  %v318 = vpack.c.bf16 %v314, %v314
  %v319 = vpack.c.bf16 %v315, %v315
  %v320 = vpack.c.bf16 %v316, %v316
  %v321 = vld [vmem:[%s10] sm:$0xf]
  %v322 = vld [vmem:[%s10 + $0x4] sm:$0xf]
  %v323 = vld [vmem:[%s10 + $0x8] sm:$0xf]
  %v324 = vld [vmem:[%s10 + $0xc] sm:$0xf]
  %v325 = vunpack.c.l.bf16 %v317
  %v326 = vunpack.c.l.bf16 %v318
  %v327 = vunpack.c.l.bf16 %v319
  %v328 = vunpack.c.l.bf16 %v320
  %v329 = vunpack.c.l.bf16 %v321
  %v330 = vunpack.c.l.bf16 %v322
  %v331 = vunpack.c.l.bf16 %v323
  %v332 = vunpack.c.l.bf16 %v324
  %v333 = vmul.f32 %v325, %v329
  %v334 = vmul.f32 %v326, %v330
  %v335 = vmul.f32 %v327, %v331
  %v336 = vmul.f32 %v328, %v332
  %v337 = vpack.c.bf16 %v334, %v333
  %v338 = vpack.c.bf16 %v336, %v335
  %v339 = vld [vmem:[%s11] sm:$0xf]
  %v340 = vld [vmem:[%s11 + $0x4] sm:$0xf]
  %v341 = vld [vmem:[%s11 + $0x8] sm:$0xf]
  %v342 = vld [vmem:[%s11 + $0xc] sm:$0xf]
  %v343 = vld [vmem:[%s11 + $0x10] sm:$0xf]
  %v344 = vld [vmem:[%s11 + $0x14] sm:$0xf]
  %v345 = vld [vmem:[%s11 + $0x18] sm:$0xf]
  %v346 = vld [vmem:[%s11 + $0x1c] sm:$0xf]
  %v347 = vld [vmem:[%s11 + $0x20] sm:$0xf]
  %v348 = vld [vmem:[%s11 + $0x24] sm:$0xf]
  %v349 = vld [vmem:[%s11 + $0x28] sm:$0xf]
  %v350 = vld [vmem:[%s11 + $0x2c] sm:$0xf]
  %v351 = vld [vmem:[%s11 + $0x30] sm:$0xf]
  %v352 = vld [vmem:[%s11 + $0x34] sm:$0xf]
  %v353 = vld [vmem:[%s11 + $0x38] sm:$0xf]
  %v354 = vld [vmem:[%s11 + $0x3c] sm:$0xf]
  %v355 = vld [vmem:[%s12] sm:$0x1]
  %v357 = vperm.slane %v355, 0
  %v375 = vunpack.c.l.b16 %v339
  %v376 = vunpack.c.l.b16 %v340
  %v377 = vunpack.c.l.b16 %v341
  %v378 = vunpack.c.l.b16 %v342
  %v379 = vunpack.c.l.b16 %v343
  %v380 = vunpack.c.l.b16 %v344
  %v381 = vunpack.c.l.b16 %v345
  %v382 = vunpack.c.l.b16 %v346
  %v383 = vunpack.c.l.b16 %v347
  %v384 = vunpack.c.l.b16 %v348
  %v385 = vunpack.c.l.b16 %v349
  %v386 = vunpack.c.l.b16 %v350
  %v387 = vunpack.c.l.b16 %v351
  %v388 = vunpack.c.l.b16 %v352
  %v389 = vunpack.c.l.b16 %v353
  %v390 = vunpack.c.l.b16 %v354
  %v391 = vpack.c.b16 %v376, %v375
  %v392 = vpack.c.b16 %v378, %v377
  %v393 = vpack.c.b16 %v380, %v379
  %v394 = vpack.c.b16 %v382, %v381
  %v395 = vpack.c.b16 %v384, %v383
  %v396 = vpack.c.b16 %v386, %v385
  %v397 = vpack.c.b16 %v388, %v387
  %v398 = vpack.c.b16 %v390, %v389
  %407 = vmatpush.bf16.msra.mxu0 %v398
  %408 = vmatpush.bf16.msra.mxu0 %v397
  %409 = vmatpush.bf16.msra.mxu0 %v396
  %410 = vmatpush.bf16.msra.mxu0 %v395
  %411 = vmatpush.bf16.msra.mxu0 %v394
  %412 = vmatpush.bf16.msra.mxu0 %v393
  %413 = vmatpush.bf16.msra.mxu0 %v392
  %414 = vmatpush.bf16.msra.mxu0 %v391
  %415 = vmatmul.bf16.gmra.mxu0 %v337
  %v416 = vpop.f32.mrf.mxu0
  %v417 = vadd.f32 %v357, %v416
  %v418 = vpop.f32.mrf.mxu0
  %v419 = vadd.f32 %v357, %v418
  %420 = vmatmul.bf16.gmra.mxu0 %v338
  %v421 = vpop.f32.mrf.mxu0
  %v422 = vadd.f32 %v357, %v421
  %v423 = vpop.f32.mrf.mxu0
  %v424 = vadd.f32 %v357, %v423
  %425 = vdwg.mxu0
  %v426 = vadd.f32 %v417, %v419
  %v427 = vadd.f32 %v426, %v422
  %v428 = vadd.f32 %v427, %v424
  %v429 = vrot.slane %v428, 4
  %v430 = vadd.f32 %v428, %v429
  %v431 = vrot.slane %v430, 2
  %v432 = vadd.f32 %v430, %v431
  %v433 = vrot.slane %v432, 1
  %v434 = vadd.f32 %v432, %v433
  %v435 = vmul.f32 %v434, %v205
  %v436 = vmul.f32 %v417, %v417
  %v437 = vmul.f32 %v419, %v419
  %v438 = vmul.f32 %v422, %v422
  %v439 = vmul.f32 %v424, %v424
  %v440 = vadd.f32 %v436, %v437
  %v441 = vadd.f32 %v440, %v438
  %v442 = vadd.f32 %v441, %v439
  %v443 = vrot.slane %v442, 4
  %v444 = vadd.f32 %v442, %v443
  %v445 = vrot.slane %v444, 2
  %v446 = vadd.f32 %v444, %v445
  %v447 = vrot.slane %v446, 1
  %v448 = vadd.f32 %v446, %v447
  %v449 = vmul.f32 %v448, %v205
  %v450 = vmul.f32 %v435, %v435
  %v451 = vsub.f32 %v449, %v450
  %v452 = vld [vmem:[%s8] sm:$0x1]
  %v453 = vadd.f32 %v451, 1e-05
  %v454 = vrsqrt.pop %v453
  %v455 = vmul.f32 %v454, %v453
  %v456 = vmul.f32 %v455, %v454
  %v457 = vmul.f32 0.5, %v456
  %v458 = vsub.f32 1.5, %v457
  %v459 = vmul.f32 %v454, %v458
  %vm460 = vweird.f32 %v453
  %vm461 = vweird.f32 %v454
  %vm462 = vmor %vm460, %vm461
  %v463 = vsel %vm462, %v454, %v459
  %v464 = vmul.f32 %v452, %v463
  %v465 = vld [vmem:[%s9] sm:$0x1]
  %v466 = vmul.f32 %v435, %v464
  %v467 = vsub.f32 %v465, %v466
  %v469 = vperm.slane %v464, 0
  %v471 = vmul.f32 %v417, %v469
  %v472 = vmul.f32 %v419, %v469
  %v473 = vmul.f32 %v422, %v469
  %v474 = vmul.f32 %v424, %v469
  %v476 = vperm.slane %v467, 0
  %v478 = vadd.f32 %v471, %v476
  %v479 = vadd.f32 %v472, %v476
  %v480 = vadd.f32 %v473, %v476
  %v481 = vadd.f32 %v474, %v476
  %v482 = vmax.f32 %v478, 0.0
  %v483 = vmax.f32 %v479, 0.0
  %v484 = vmax.f32 %v480, 0.0
  %v485 = vmax.f32 %v481, 0.0
  %v486 = vpack.c.bf16 %v482, %v482
  %v487 = vpack.c.bf16 %v483, %v483
  %v488 = vpack.c.bf16 %v484, %v484
  %v489 = vpack.c.bf16 %v485, %v485
  %v490 = vld [vmem:[%s13] sm:$0xf]
  %v491 = vld [vmem:[%s13 + $0x4] sm:$0xf]
  %v492 = vld [vmem:[%s13 + $0x8] sm:$0xf]
  %v493 = vld [vmem:[%s13 + $0xc] sm:$0xf]
  %v494 = vunpack.c.l.bf16 %v486
  %v495 = vunpack.c.l.bf16 %v487
  %v496 = vunpack.c.l.bf16 %v488
  %v497 = vunpack.c.l.bf16 %v489
  %v498 = vunpack.c.l.bf16 %v490
  %v499 = vunpack.c.l.bf16 %v491
  %v500 = vunpack.c.l.bf16 %v492
  %v501 = vunpack.c.l.bf16 %v493
  %v502 = vmul.f32 %v494, %v498
  %v503 = vmul.f32 %v495, %v499
  %v504 = vmul.f32 %v496, %v500
  %v505 = vmul.f32 %v497, %v501
  %v506 = vpack.c.bf16 %v503, %v502
  %v507 = vpack.c.bf16 %v505, %v504
  %v508 = vld [vmem:[%s14] sm:$0xf]
  %v509 = vld [vmem:[%s14 + $0x4] sm:$0xf]
  %v510 = vld [vmem:[%s14 + $0x8] sm:$0xf]
  %v511 = vld [vmem:[%s14 + $0xc] sm:$0xf]
  %v512 = vld [vmem:[%s14 + $0x10] sm:$0xf]
  %v513 = vld [vmem:[%s14 + $0x14] sm:$0xf]
  %v514 = vld [vmem:[%s14 + $0x18] sm:$0xf]
  %v515 = vld [vmem:[%s14 + $0x1c] sm:$0xf]
  %v516 = vld [vmem:[%s14 + $0x20] sm:$0xf]
  %v517 = vld [vmem:[%s14 + $0x24] sm:$0xf]
  %v518 = vld [vmem:[%s14 + $0x28] sm:$0xf]
  %v519 = vld [vmem:[%s14 + $0x2c] sm:$0xf]
  %v520 = vld [vmem:[%s14 + $0x30] sm:$0xf]
  %v521 = vld [vmem:[%s14 + $0x34] sm:$0xf]
  %v522 = vld [vmem:[%s14 + $0x38] sm:$0xf]
  %v523 = vld [vmem:[%s14 + $0x3c] sm:$0xf]
  %v524 = vld [vmem:[%s15] sm:$0x1]
  %v526 = vperm.slane %v524, 0
  %v544 = vunpack.c.l.b16 %v508
  %v545 = vunpack.c.l.b16 %v509
  %v546 = vunpack.c.l.b16 %v510
  %v547 = vunpack.c.l.b16 %v511
  %v548 = vunpack.c.l.b16 %v512
  %v549 = vunpack.c.l.b16 %v513
  %v550 = vunpack.c.l.b16 %v514
  %v551 = vunpack.c.l.b16 %v515
  %v552 = vunpack.c.l.b16 %v516
  %v553 = vunpack.c.l.b16 %v517
  %v554 = vunpack.c.l.b16 %v518
  %v555 = vunpack.c.l.b16 %v519
  %v556 = vunpack.c.l.b16 %v520
  %v557 = vunpack.c.l.b16 %v521
  %v558 = vunpack.c.l.b16 %v522
  %v559 = vunpack.c.l.b16 %v523
  %v560 = vpack.c.b16 %v545, %v544
  %v561 = vpack.c.b16 %v547, %v546
  %v562 = vpack.c.b16 %v549, %v548
  %v563 = vpack.c.b16 %v551, %v550
  %v564 = vpack.c.b16 %v553, %v552
  %v565 = vpack.c.b16 %v555, %v554
  %v566 = vpack.c.b16 %v557, %v556
  %v567 = vpack.c.b16 %v559, %v558
  %576 = vmatpush.bf16.msra.mxu0 %v567
  %577 = vmatpush.bf16.msra.mxu0 %v566
  %578 = vmatpush.bf16.msra.mxu0 %v565
  %579 = vmatpush.bf16.msra.mxu0 %v564
  %580 = vmatpush.bf16.msra.mxu0 %v563
  %581 = vmatpush.bf16.msra.mxu0 %v562
  %582 = vmatpush.bf16.msra.mxu0 %v561
  %583 = vmatpush.bf16.msra.mxu0 %v560
  %584 = vmatmul.bf16.gmra.mxu0 %v506
  %v585 = vpop.f32.mrf.mxu0
  %v586 = vadd.f32 %v526, %v585
  %v587 = vpop.f32.mrf.mxu0
  %v588 = vadd.f32 %v526, %v587
  %589 = vmatmul.bf16.gmra.mxu0 %v507
  %v590 = vpop.f32.mrf.mxu0
  %v591 = vadd.f32 %v526, %v590
  %v592 = vpop.f32.mrf.mxu0
  %v593 = vadd.f32 %v526, %v592
  %594 = vdwg.mxu0
  %v595 = vadd.f32 %v586, %v253
  %v596 = vadd.f32 %v588, %v254
  %v597 = vadd.f32 %v591, %v255
  %v598 = vadd.f32 %v593, %v256
  %v599 = vpack.c.bf16 %v595, %v595
  %v600 = vpack.c.bf16 %v596, %v596
  %v601 = vpack.c.bf16 %v597, %v597
  %v602 = vpack.c.bf16 %v598, %v598
  %v603 = vld [vmem:[%s16] sm:$0xf]
  %v604 = vld [vmem:[%s16 + $0x4] sm:$0xf]
  %v605 = vld [vmem:[%s16 + $0x8] sm:$0xf]
  %v606 = vld [vmem:[%s16 + $0xc] sm:$0xf]
  %v607 = vunpack.c.l.bf16 %v599
  %v608 = vunpack.c.l.bf16 %v600
  %v609 = vunpack.c.l.bf16 %v601
  %v610 = vunpack.c.l.bf16 %v602
  %v611 = vunpack.c.l.bf16 %v603
  %v612 = vunpack.c.l.bf16 %v604
  %v613 = vunpack.c.l.bf16 %v605
  %v614 = vunpack.c.l.bf16 %v606
  %v615 = vmul.f32 %v607, %v611
  %v616 = vmul.f32 %v608, %v612
  %v617 = vmul.f32 %v609, %v613
  %v618 = vmul.f32 %v610, %v614
  %v619 = vpack.c.bf16 %v616, %v615
  %v620 = vpack.c.bf16 %v618, %v617
  %v621 = vld [vmem:[%s17] sm:$0xf]
  %v622 = vld [vmem:[%s17 + $0x4] sm:$0xf]
  %v623 = vld [vmem:[%s17 + $0x8] sm:$0xf]
  %v624 = vld [vmem:[%s17 + $0xc] sm:$0xf]
  %v625 = vld [vmem:[%s17 + $0x10] sm:$0xf]
  %v626 = vld [vmem:[%s17 + $0x14] sm:$0xf]
  %v627 = vld [vmem:[%s17 + $0x18] sm:$0xf]
  %v628 = vld [vmem:[%s17 + $0x1c] sm:$0xf]
  %v629 = vld [vmem:[%s17 + $0x20] sm:$0xf]
  %v630 = vld [vmem:[%s17 + $0x24] sm:$0xf]
  %v631 = vld [vmem:[%s17 + $0x28] sm:$0xf]
  %v632 = vld [vmem:[%s17 + $0x2c] sm:$0xf]
  %v633 = vld [vmem:[%s17 + $0x30] sm:$0xf]
  %v634 = vld [vmem:[%s17 + $0x34] sm:$0xf]
  %v635 = vld [vmem:[%s17 + $0x38] sm:$0xf]
  %v636 = vld [vmem:[%s17 + $0x3c] sm:$0xf]
  %v637 = vld [vmem:[%s18] sm:$0x1]
  %v639 = vperm.slane %v637, 0
  %v657 = vunpack.c.l.b16 %v621
  %v658 = vunpack.c.l.b16 %v622
  %v659 = vunpack.c.l.b16 %v623
  %v660 = vunpack.c.l.b16 %v624
  %v661 = vunpack.c.l.b16 %v625
  %v662 = vunpack.c.l.b16 %v626
  %v663 = vunpack.c.l.b16 %v627
  %v664 = vunpack.c.l.b16 %v628
  %v665 = vunpack.c.l.b16 %v629
  %v666 = vunpack.c.l.b16 %v630
  %v667 = vunpack.c.l.b16 %v631
  %v668 = vunpack.c.l.b16 %v632
  %v669 = vunpack.c.l.b16 %v633
  %v670 = vunpack.c.l.b16 %v634
  %v671 = vunpack.c.l.b16 %v635
  %v672 = vunpack.c.l.b16 %v636
  %v673 = vpack.c.b16 %v658, %v657
  %v674 = vpack.c.b16 %v660, %v659
  %v675 = vpack.c.b16 %v662, %v661
  %v676 = vpack.c.b16 %v664, %v663
  %v677 = vpack.c.b16 %v666, %v665
  %v678 = vpack.c.b16 %v668, %v667
  %v679 = vpack.c.b16 %v670, %v669
  %v680 = vpack.c.b16 %v672, %v671
  %689 = vmatpush.bf16.msra.mxu0 %v680
  %690 = vmatpush.bf16.msra.mxu0 %v679
  %691 = vmatpush.bf16.msra.mxu0 %v678
  %692 = vmatpush.bf16.msra.mxu0 %v677
  %693 = vmatpush.bf16.msra.mxu0 %v676
  %694 = vmatpush.bf16.msra.mxu0 %v675
  %695 = vmatpush.bf16.msra.mxu0 %v674
  %696 = vmatpush.bf16.msra.mxu0 %v673
  %697 = vmatmul.bf16.gmra.mxu0 %v619
  %v698 = vpop.f32.mrf.mxu0
  %v699 = vadd.f32 %v639, %v698
  %v700 = vpop.f32.mrf.mxu0
  %v701 = vadd.f32 %v639, %v700
  %702 = vmatmul.bf16.gmra.mxu0 %v620
  %v703 = vpop.f32.mrf.mxu0
  %v704 = vadd.f32 %v639, %v703
  %v705 = vpop.f32.mrf.mxu0
  %v706 = vadd.f32 %v639, %v705
  %707 = vdwg.mxu0
  %v708 = vadd.f32 %v699, %v701
  %v709 = vadd.f32 %v708, %v704
  %v710 = vadd.f32 %v709, %v706
  %v711 = vrot.slane %v710, 4
  %v712 = vadd.f32 %v710, %v711
  %v713 = vrot.slane %v712, 2
  %v714 = vadd.f32 %v712, %v713
  %v715 = vrot.slane %v714, 1
  %v716 = vadd.f32 %v714, %v715
  %v717 = vmul.f32 %v716, %v205
  %v718 = vmul.f32 %v699, %v699
  %v719 = vmul.f32 %v701, %v701
  %v720 = vmul.f32 %v704, %v704
  %v721 = vmul.f32 %v706, %v706
  %v722 = vadd.f32 %v718, %v719
  %v723 = vadd.f32 %v722, %v720
  %v724 = vadd.f32 %v723, %v721
  %v725 = vrot.slane %v724, 4
  %v726 = vadd.f32 %v724, %v725
  %v727 = vrot.slane %v726, 2
  %v728 = vadd.f32 %v726, %v727
  %v729 = vrot.slane %v728, 1
  %v730 = vadd.f32 %v728, %v729
  %v731 = vmul.f32 %v730, %v205
  %v732 = vmul.f32 %v717, %v717
  %v733 = vsub.f32 %v731, %v732
  %v734 = vld [vmem:[%s19] sm:$0x1]
  %v735 = vadd.f32 %v733, 1e-05
  %v736 = vrsqrt.pop %v735
  %v737 = vmul.f32 %v736, %v735
  %v738 = vmul.f32 %v737, %v736
  %v739 = vmul.f32 0.5, %v738
  %v740 = vsub.f32 1.5, %v739
  %v741 = vmul.f32 %v736, %v740
  %vm742 = vweird.f32 %v735
  %vm743 = vweird.f32 %v736
  %vm744 = vmor %vm742, %vm743
  %v745 = vsel %vm744, %v736, %v741
  %v746 = vmul.f32 %v734, %v745
  %v747 = vld [vmem:[%s20] sm:$0x1]
  %v748 = vmul.f32 %v717, %v746
  %v749 = vsub.f32 %v747, %v748
  %v751 = vperm.slane %v746, 0
  %v753 = vmul.f32 %v699, %v751
  %v754 = vmul.f32 %v701, %v751
  %v755 = vmul.f32 %v704, %v751
  %v756 = vmul.f32 %v706, %v751
  %v758 = vperm.slane %v749, 0
  %v760 = vadd.f32 %v753, %v758
  %v761 = vadd.f32 %v754, %v758
  %v762 = vadd.f32 %v755, %v758
  %v763 = vadd.f32 %v756, %v758
  %v764 = vmax.f32 %v760, 0.0
  %v765 = vmax.f32 %v761, 0.0
  %v766 = vmax.f32 %v762, 0.0
  %v767 = vmax.f32 %v763, 0.0
  %v768 = vpack.c.bf16 %v764, %v764
  %v769 = vpack.c.bf16 %v765, %v765
  %v770 = vpack.c.bf16 %v766, %v766
  %v771 = vpack.c.bf16 %v767, %v767
  %v772 = vld [vmem:[%s21] sm:$0xf]
  %v773 = vld [vmem:[%s21 + $0x4] sm:$0xf]
  %v774 = vld [vmem:[%s21 + $0x8] sm:$0xf]
  %v775 = vld [vmem:[%s21 + $0xc] sm:$0xf]
  %v776 = vunpack.c.l.bf16 %v768
  %v777 = vunpack.c.l.bf16 %v769
  %v778 = vunpack.c.l.bf16 %v770
  %v779 = vunpack.c.l.bf16 %v771
  %v780 = vunpack.c.l.bf16 %v772
  %v781 = vunpack.c.l.bf16 %v773
  %v782 = vunpack.c.l.bf16 %v774
  %v783 = vunpack.c.l.bf16 %v775
  %v784 = vmul.f32 %v776, %v780
  %v785 = vmul.f32 %v777, %v781
  %v786 = vmul.f32 %v778, %v782
  %v787 = vmul.f32 %v779, %v783
  %v788 = vpack.c.bf16 %v785, %v784
  %v789 = vpack.c.bf16 %v787, %v786
  %v790 = vld [vmem:[%s22] sm:$0xf]
  %v791 = vld [vmem:[%s22 + $0x4] sm:$0xf]
  %v792 = vld [vmem:[%s22 + $0x8] sm:$0xf]
  %v793 = vld [vmem:[%s22 + $0xc] sm:$0xf]
  %v794 = vld [vmem:[%s22 + $0x10] sm:$0xf]
  %v795 = vld [vmem:[%s22 + $0x14] sm:$0xf]
  %v796 = vld [vmem:[%s22 + $0x18] sm:$0xf]
  %v797 = vld [vmem:[%s22 + $0x1c] sm:$0xf]
  %v798 = vld [vmem:[%s22 + $0x20] sm:$0xf]
  %v799 = vld [vmem:[%s22 + $0x24] sm:$0xf]
  %v800 = vld [vmem:[%s22 + $0x28] sm:$0xf]
  %v801 = vld [vmem:[%s22 + $0x2c] sm:$0xf]
  %v802 = vld [vmem:[%s22 + $0x30] sm:$0xf]
  %v803 = vld [vmem:[%s22 + $0x34] sm:$0xf]
  %v804 = vld [vmem:[%s22 + $0x38] sm:$0xf]
  %v805 = vld [vmem:[%s22 + $0x3c] sm:$0xf]
  %v806 = vld [vmem:[%s23] sm:$0x1]
  %v808 = vperm.slane %v806, 0
  %v826 = vunpack.c.l.b16 %v790
  %v827 = vunpack.c.l.b16 %v791
  %v828 = vunpack.c.l.b16 %v792
  %v829 = vunpack.c.l.b16 %v793
  %v830 = vunpack.c.l.b16 %v794
  %v831 = vunpack.c.l.b16 %v795
  %v832 = vunpack.c.l.b16 %v796
  %v833 = vunpack.c.l.b16 %v797
  %v834 = vunpack.c.l.b16 %v798
  %v835 = vunpack.c.l.b16 %v799
  %v836 = vunpack.c.l.b16 %v800
  %v837 = vunpack.c.l.b16 %v801
  %v838 = vunpack.c.l.b16 %v802
  %v839 = vunpack.c.l.b16 %v803
  %v840 = vunpack.c.l.b16 %v804
  %v841 = vunpack.c.l.b16 %v805
  %v842 = vpack.c.b16 %v827, %v826
  %v843 = vpack.c.b16 %v829, %v828
  %v844 = vpack.c.b16 %v831, %v830
  %v845 = vpack.c.b16 %v833, %v832
  %v846 = vpack.c.b16 %v835, %v834
  %v847 = vpack.c.b16 %v837, %v836
  %v848 = vpack.c.b16 %v839, %v838
  %v849 = vpack.c.b16 %v841, %v840
  %858 = vmatpush.bf16.msra.mxu0 %v849
  %859 = vmatpush.bf16.msra.mxu0 %v848
  %860 = vmatpush.bf16.msra.mxu0 %v847
  %861 = vmatpush.bf16.msra.mxu0 %v846
  %862 = vmatpush.bf16.msra.mxu0 %v845
  %863 = vmatpush.bf16.msra.mxu0 %v844
  %864 = vmatpush.bf16.msra.mxu0 %v843
  %865 = vmatpush.bf16.msra.mxu0 %v842
  %866 = vmatmul.bf16.gmra.mxu0 %v788
  %v867 = vpop.f32.mrf.mxu0
  %v868 = vadd.f32 %v808, %v867
  %v869 = vpop.f32.mrf.mxu0
  %v870 = vadd.f32 %v808, %v869
  %871 = vmatmul.bf16.gmra.mxu0 %v789
  %v872 = vpop.f32.mrf.mxu0
  %v873 = vadd.f32 %v808, %v872
  %v874 = vpop.f32.mrf.mxu0
  %v875 = vadd.f32 %v808, %v874
  %876 = vdwg.mxu0
  %877 = vst [vmem:[%s24] sm:$0xff] %v868
  %878 = vst [vmem:[%s24 + $0x8] sm:$0xff] %v870
  %879 = vst [vmem:[%s24 + $0x10] sm:$0xff] %v873
  %880 = vst [vmem:[%s24 + $0x18] sm:$0xff] %v875
  // Predicated region
  $region98: #{hbnn_forward.15} parent=0 // pred_check
    _
  $region99: #{hbnn_forward.15} parent=0 // pred_check_branch
    %882 = sbr.rel (0) target = $region101
  $region100: #{hbnn_forward.15} parent=0 // pred_region
    _
  $region101: #{hbnn_forward.15} parent=0 // pred_fallthru
    _
  // Predicated region
  $region102: #{hbnn_forward.15} parent=0 // pred_check
    _
  $region103: #{hbnn_forward.15} parent=0 // pred_check_branch
    %884 = sbr.rel (0) target = $region105
  $region104: #{hbnn_forward.15} parent=0 // pred_region
    _
  $region105: #{hbnn_forward.15} parent=0 // pred_fallthru
    _

</llo_original>
